<compile_context>
chip_gen: v7x
topology: tpu7x:2x2x1
jax: 0.10.0
libtpu: 0.0.40
codegen_flags: <defaults>
</compile_context>

<pallas_src>
import functools

import jax
import jax.numpy as jnp
from jax import lax
from jax.experimental import pallas as pl
from jax.experimental.pallas import tpu as pltpu

EPS = float(jnp.finfo(jnp.float32).eps)  # == torch.finfo(torch.float32).eps
_VMEM_LIMIT = 48 * 1024 * 1024           # fits v5e/v6e (128 MiB) and v7x (64 MiB)


# ----------------------------------------------------------------------------
# helpers
# ----------------------------------------------------------------------------
def _round_up(n, m):
    return ((n + m - 1) // m) * m


def _choose_tile(n, pref):
    """Pick a sublane-aligned tile size (and the padded extent it divides)."""
    if n >= pref:
        return pref, _round_up(n, pref)
    t = _round_up(max(n, 8), 8)
    return t, t


def _pad_rows(a, rows):
    if a.shape[0] == rows:
        return a
    pad = jnp.zeros((rows - a.shape[0],) + a.shape[1:], a.dtype)
    return jnp.concatenate([a, pad], axis=0)


def _pad_cols(a, cols):
    if a.shape[1] == cols:
        return a
    pad = jnp.zeros((a.shape[0], cols - a.shape[1]), a.dtype)
    return jnp.concatenate([a, pad], axis=1)


def _params(sem):
    return pltpu.CompilerParams(dimension_semantics=sem,
                                vmem_limit_bytes=_VMEM_LIMIT)


# ----------------------------------------------------------------------------
# Kernel 1: per-sample CE grads wrt the linear weight, feature-subsampled in
# kernel (fused sample_feats), plus lane-dense (class-padded) logits.
# ----------------------------------------------------------------------------
def _grad_sub_kernel(x_ref, w_ref, y1h_ref, selx_ref, selc_ref,
                     grads_ref, logits_ref, *, num_classes):
    x = x_ref[...]        # (chunk, D)
    w = w_ref[...]        # (CP, D); rows >= num_classes are zero
    y1h = y1h_ref[...]    # (chunk, CP); cols >= num_classes are zero

    # logits over the padded (lane-dense) class axis
    logits = lax.dot_general(x, w, (((1,), (1,)), ((), ())),
                             preferred_element_type=jnp.float32)   # (chunk, CP)
    cls = lax.broadcasted_iota(jnp.int32, logits.shape, 1)
    masked = jnp.where(cls < num_classes, logits, -jnp.inf)
    m = jnp.max(masked, axis=-1, keepdims=True)
    e = jnp.exp(masked - m)                       # padded classes -> exp(-inf)=0
    p = e / jnp.sum(e, axis=-1, keepdims=True)    # softmax over real classes
    diff = p - y1h                                # (chunk, CP); padded cols 0

    # fused sample_feats: grads_sub[:, k] = diff[:, c_k] * x[:, d_k]
    xg = jnp.dot(x, selx_ref[...], preferred_element_type=jnp.float32)     # (chunk, cutoff)
    dg = jnp.dot(diff, selc_ref[...], preferred_element_type=jnp.float32)  # (chunk, cutoff)
    grads_ref[...] = xg * dg
    logits_ref[...] = logits


def per_sample_grads_sub_and_logits(x_flat, w, y_labels, sub_idx, *, chunk_pref=256):
    N, D = x_flat.shape
    C = w.shape[0]
    cutoff = int(sub_idx.shape[0])
    CP = _round_up(max(C, 128), 128)          # lane-dense padded class axis

    chunk, Np = _choose_tile(N, chunk_pref)   # pad instead of dropping remainder
    xp = _pad_rows(x_flat.astype(jnp.float32), Np)
    y1h = _pad_rows(jax.nn.one_hot(y_labels, CP, dtype=jnp.float32), Np)
    wp = _pad_rows(w.astype(jnp.float32), CP)                     # (CP, D)

    d_k = sub_idx % D
    c_k = sub_idx // D
    selx = jax.nn.one_hot(d_k, D, dtype=jnp.float32).T            # (D, cutoff)
    selc = jax.nn.one_hot(c_k, CP, dtype=jnp.float32).T           # (CP, cutoff)

    grads, logits = pl.pallas_call(
        functools.partial(_grad_sub_kernel, num_classes=C),
        out_shape=(jax.ShapeDtypeStruct((Np, cutoff), jnp.float32),
                   jax.ShapeDtypeStruct((Np, CP), jnp.float32)),
        grid_spec=pltpu.PrefetchScalarGridSpec(
            num_scalar_prefetch=0,
            grid=(Np // chunk,),
            in_specs=[pl.BlockSpec((chunk, D), lambda i: (i, 0)),
                      pl.BlockSpec((CP, D), lambda i: (0, 0)),
                      pl.BlockSpec((chunk, CP), lambda i: (i, 0)),
                      pl.BlockSpec((D, cutoff), lambda i: (0, 0)),
                      pl.BlockSpec((CP, cutoff), lambda i: (0, 0))],
            out_specs=[pl.BlockSpec((chunk, cutoff), lambda i: (i, 0)),
                       pl.BlockSpec((chunk, CP), lambda i: (i, 0))]),
        compiler_params=_params(("parallel",)),
    )(xp, wp, y1h, selx, selc)
    return grads[:N], logits[:N, :C]


# ----------------------------------------------------------------------------
# Kernel 2: G = M^T @ M (calculate_rank, batch_first=False).  Symmetric ->
# only upper-triangle feature-tile pairs are computed; batch contraction is a
# trailing "arbitrary" axis accumulated in VMEM scratch.
# ----------------------------------------------------------------------------
def _gram_ut_kernel(ti_ref, tj_ref, mi_ref, mj_ref, g_ref, acc_ref):
    b = pl.program_id(1)

    @pl.when(b == 0)
    def _():
        acc_ref[...] = jnp.zeros_like(acc_ref)

    acc_ref[...] += lax.dot_general(mi_ref[...], mj_ref[...],
                                    (((0,), (0,)), ((), ())),
                                    preferred_element_type=jnp.float32)

    @pl.when(b == pl.num_programs(1) - 1)
    def _():
        g_ref[...] = acc_ref[...]


def gramian_transposed(mat, *, tn_pref=256):
    N, F = mat.shape
    Fp = _round_up(F, 128)
    tf = 256 if Fp % 256 == 0 else 128         # 256 matches v6e/v7x MXU; 128 ok on v5e
    nbf = Fp // tf
    tn, Np = _choose_tile(N, tn_pref)
    nbb = Np // tn

    mp = _pad_cols(_pad_rows(mat.astype(jnp.float32), Np), Fp)   # zero pads: no effect on G

    pairs = [(i, j) for i in range(nbf) for j in range(i, nbf)]  # upper triangle only
    ti = jnp.asarray([p[0] for p in pairs], dtype=jnp.int32)
    tj = jnp.asarray([p[1] for p in pairs], dtype=jnp.int32)

    g_ut = pl.pallas_call(
        _gram_ut_kernel,
        out_shape=jax.ShapeDtypeStruct((Fp, Fp), jnp.float32),
        grid_spec=pltpu.PrefetchScalarGridSpec(
            num_scalar_prefetch=2,
            grid=(len(pairs), nbb),
            in_specs=[pl.BlockSpec((tn, tf), lambda t, b, ti_r, tj_r: (b, ti_r[t])),
                      pl.BlockSpec((tn, tf), lambda t, b, ti_r, tj_r: (b, tj_r[t]))],
            out_specs=pl.BlockSpec((tf, tf), lambda t, b, ti_r, tj_r: (ti_r[t], tj_r[t])),
            scratch_shapes=[pltpu.VMEM((tf, tf), jnp.float32)]),
        compiler_params=_params(("parallel", "arbitrary")),
    )(ti, tj, mp, mp)

    ut = jnp.triu(g_ut)                        # only these elements were written
    g = ut + jnp.triu(g_ut, k=1).T             # mirror to the lower triangle
    return g[:F, :F]


# ----------------------------------------------------------------------------
# Kernel 3: row-normalized pairwise cosine matrix (variance_angle_pairwise),
# tiled over (row-block, col-block) so it fits VMEM at real sizes.
# ----------------------------------------------------------------------------
def _cosine_kernel(xi_ref, xj_ref, cos_ref):
    xi = xi_ref[...]                                          # (tn, F)
    xj = xj_ref[...]                                          # (tn, F)
    ni = jnp.sqrt(jnp.sum(xi * xi, axis=-1, keepdims=True))
    nj = jnp.sqrt(jnp.sum(xj * xj, axis=-1, keepdims=True))
    # x_k /= (||x_k|| + eps); reciprocal runs on the EUP instead of VPU divides
    xin = xi * pl.reciprocal(ni + EPS, approx=True)
    xjn = xj * pl.reciprocal(nj + EPS, approx=True)
    cos_ref[...] = lax.dot_general(xin, xjn, (((1,), (1,)), ((), ())),
                                   preferred_element_type=jnp.float32)


def pairwise_cosine(mat, *, tn_pref=256):
    N, F = mat.shape
    tn, Np = _choose_tile(N, tn_pref)
    nb = Np // tn
    mp = _pad_rows(mat.astype(jnp.float32), Np)
    cos = pl.pallas_call(
        _cosine_kernel,
        out_shape=jax.ShapeDtypeStruct((Np, Np), jnp.float32),
        grid_spec=pltpu.PrefetchScalarGridSpec(
            num_scalar_prefetch=0,
            grid=(nb, nb),
            in_specs=[pl.BlockSpec((tn, F), lambda i, j: (i, 0)),
                      pl.BlockSpec((tn, F), lambda i, j: (j, 0))],
            out_specs=pl.BlockSpec((tn, tn), lambda i, j: (i, j))),
        compiler_params=_params(("parallel", "parallel")),
    )(mp, mp)
    return cos[:N, :N]


# ----------------------------------------------------------------------------
# Glue: variance_angle_pairwise statistics (masked-mean reproduction of the
# triu / nonzero selection in the reference code; cnt guarded against 0).
# ----------------------------------------------------------------------------
def variance_angle_pairwise_stats(abs_angle, y, classes):
    N = abs_angle.shape[0]
    triu = jnp.triu(jnp.ones((N, N), dtype=bool), k=1)
    nz_all = triu & (abs_angle != 0)
    cnt_all = jnp.maximum(jnp.sum(nz_all), 1)
    general_mean = jnp.sum(jnp.where(nz_all, abs_angle, 0.0)) / cnt_all

    within = jnp.float32(0.0)
    between = jnp.float32(0.0)
    for c in classes:
        m = (y == c)
        pm = triu & m[:, None] & m[None, :]
        nz = pm & (abs_angle != 0)
        cnt = jnp.maximum(jnp.sum(nz), 1)
        off_mean = jnp.sum(jnp.where(nz, abs_angle, 0.0)) / cnt
        within = within + jnp.sum(jnp.where(nz, (abs_angle - off_mean) ** 2, 0.0)) / cnt
        between = between + (off_mean - general_mean) ** 2

    k = float(len(classes))
    within = within / k
    between = between / k
    return within, between, within + between


# ----------------------------------------------------------------------------
if __name__ == "__main__":
    key = jax.random.PRNGKey(0)
    num_classes = 4
    per_class = 8          # stand-in for per_class_size=500
    C_in, H, W = 4, 8, 8
    D = C_in * H * W       # 256 flattened input features
    cutoff = 256           # feature subsampling cutoff
    N = num_classes * per_class  # 32 samples, class-balanced

    k1, k2, k3 = jax.random.split(key, 3)
    # deterministic synthetic, class-balanced "test_proper" set (NCHW)
    x_imgs = jax.random.normal(k1, (N, C_in, H, W), dtype=jnp.float32)
    y_test = jnp.repeat(jnp.arange(num_classes, dtype=jnp.int32), per_class)
    # deterministic model parameter (linear classifier weight, no bias)
    w = 0.05 * jax.random.normal(k2, (num_classes, D), dtype=jnp.float32)

    x_flat = x_imgs.reshape(N, -1)

    # --- sample_feats: sorted random feature subsample of the C*D grad features ---
    F_full = num_classes * D
    if F_full > cutoff:
        sub_idx = jnp.sort(jax.random.permutation(k3, F_full)[:cutoff]).astype(jnp.int32)
    else:
        sub_idx = jnp.arange(F_full, dtype=jnp.int32)

    # --- ft_criterion + prepare_variables + sample_feats, fused & chunked ---
    grads_sub, y_pred = per_sample_grads_sub_and_logits(x_flat, w, y_test, sub_idx)

    evaluators = {}

    # --- misclassification per class ---
    y_pred_label = jnp.argmax(y_pred, axis=1)
    for c in range(num_classes):
        mask = (y_test == c)
        mis = jnp.sum(jnp.where(mask, (y_pred_label != y_test).astype(jnp.float32),
                                0.0)) / jnp.sum(mask)
        evaluators[f'misclassification_per_class/{c}'] = float(mis)

    # --- prepare_and_calculate_ranks (normalize=False, batch_first=False) ---
    name = "classifier.weight"
    prefix = "ranks_grads_nonnormalized_feature"
    postfix = "____test____eval"
    gram = gramian_transposed(grads_sub)                 # (F, F) = M^T M  (Pallas)
    # TODO(synk): torch.linalg.matrix_rank (SVD) has no Pallas equivalent; jnp.linalg glue.
    rank = int(jnp.linalg.matrix_rank(gram))
    square_stable_rank = float(jnp.trace(gram))
    denom = grads_sub.shape[1]                           # matrix.T.size(0) == F
    evaluators[f'{prefix}/{name}{postfix}'] = rank
    evaluators[f'{prefix}_ratio/{name}{postfix}'] = rank / denom
    evaluators[f'{prefix}_square_stable/{name}{postfix}'] = square_stable_rank
    evaluators[f'{prefix}_ratio_square_stable/{name}{postfix}'] = square_stable_rank / denom

    # --- variance_angle_pairwise ---
    cos = pairwise_cosine(grads_sub)                     # (N, N)  (Pallas)
    # TODO(synk): arccos transcendental + class-masked covariance stats left in JAX glue.
    abs_angle = jnp.abs(jnp.arccos(jnp.clip(cos, -1.0, 1.0)))
    within, between, total = variance_angle_pairwise_stats(
        abs_angle, y_test, list(range(num_classes)))
    evaluators[f'within_cov_abs_angle/{name}'] = float(within)
    evaluators[f'between_cov_abs_angle/{name}'] = float(between)
    evaluators[f'total_cov_abs_angle/{name}'] = float(total)
    evaluators[f'within_cov_abs_angle_normalized/{name}'] = float(within / (total + EPS))
    evaluators[f'between_cov_abs_angle_normalized/{name}'] = float(between / (total + EPS))

    evaluators['steps/tunnel_grads'] = 0

    jax.block_until_ready((grads_sub, y_pred, gram, cos))
    print("KERNEL_OK")
</pallas_src>

<mosaic_0001>
module attributes {stable_mosaic.version = 11 : i64} {
  func.func @_grad_sub_kernel(%arg0: i32, %arg1: memref<32x256xf32, #tpu.memory_space<vmem>>, %arg2: memref<128x256xf32, #tpu.memory_space<vmem>>, %arg3: memref<32x128xf32, #tpu.memory_space<vmem>>, %arg4: memref<256x256xf32, #tpu.memory_space<vmem>>, %arg5: memref<128x256xf32, #tpu.memory_space<vmem>>, %arg6: memref<32x256xf32, #tpu.memory_space<vmem>>, %arg7: memref<32x128xf32, #tpu.memory_space<vmem>>) attributes {dimension_semantics = [#tpu.dimension_semantics<parallel>], iteration_bounds = array<i64: 1>, scalar_prefetch = 0 : i64, scratch_operands = 0 : i64, tpu.core_type = #tpu.core_type<tc>, window_params = [{transform_indices = @transform_0, window_bounds = array<i64: 32, 256>}, {pipeline_mode = #tpu.pipeline_mode<synchronous>, transform_indices = @transform_1, window_bounds = array<i64: 128, 256>}, {transform_indices = @transform_2, window_bounds = array<i64: 32, 128>}, {pipeline_mode = #tpu.pipeline_mode<synchronous>, transform_indices = @transform_3, window_bounds = array<i64: 256, 256>}, {pipeline_mode = #tpu.pipeline_mode<synchronous>, transform_indices = @transform_4, window_bounds = array<i64: 128, 256>}, {transform_indices = @transform_5, window_bounds = array<i64: 32, 256>}, {transform_indices = @transform_6, window_bounds = array<i64: 32, 128>}]} {
    %c0 = arith.constant 0 : index
    %c0_0 = arith.constant 0 : index
    %0 = vector.load %arg1[%c0, %c0_0] : memref<32x256xf32, #tpu.memory_space<vmem>>, vector<32x256xf32>
    %c0_1 = arith.constant 0 : index
    %c0_2 = arith.constant 0 : index
    %1 = vector.load %arg2[%c0_1, %c0_2] : memref<128x256xf32, #tpu.memory_space<vmem>>, vector<128x256xf32>
    %c0_3 = arith.constant 0 : index
    %c0_4 = arith.constant 0 : index
    %2 = vector.load %arg3[%c0_3, %c0_4] : memref<32x128xf32, #tpu.memory_space<vmem>>, vector<32x128xf32>
    %cst = arith.constant dense<0.000000e+00> : vector<32x128xf32>
    %3 = tpu.matmul %0, %1, %cst {dimension_numbers = #tpu.dot_dimension_numbers<[1], [1], [0], [0], [0, 0, 1, 0], [], []>} : vector<32x256xf32>, vector<128x256xf32>, vector<32x128xf32> -> vector<32x128xf32>
    %4 = tpu.iota {dimensions = array<i32: 1>} : vector<32x128xi32>
    %c4_i32 = arith.constant 4 : i32
    %5 = vector.broadcast %c4_i32 : i32 to vector<32x128xi32>
    %6 = arith.cmpi slt, %4, %5 : vector<32x128xi32>
    %cst_5 = arith.constant 0xFF800000 : f32
    %7 = vector.broadcast %cst_5 : f32 to vector<32x128xf32>
    %8 = arith.select %6, %3, %7 : vector<32x128xi1>, vector<32x128xf32>
    %cst_6 = arith.constant dense<0xFF800000> : vector<32xf32>
    %9 = vector.multi_reduction <maximumf>, %8, %cst_6 [1] : vector<32x128xf32> to vector<32xf32>
    %10 = vector.shape_cast %9 : vector<32xf32> to vector<32x1xf32>
    %11 = vector.broadcast %10 : vector<32x1xf32> to vector<32x128xf32>
    %12 = arith.subf %8, %11 : vector<32x128xf32>
    %13 = math.exp %12 : vector<32x128xf32>
    %cst_7 = arith.constant dense<0.000000e+00> : vector<32xf32>
    %14 = vector.multi_reduction <add>, %13, %cst_7 [1] : vector<32x128xf32> to vector<32xf32>
    %15 = vector.shape_cast %14 : vector<32xf32> to vector<32x1xf32>
    %16 = vector.broadcast %15 : vector<32x1xf32> to vector<32x128xf32>
    %17 = arith.divf %13, %16 : vector<32x128xf32>
    %18 = arith.subf %17, %2 : vector<32x128xf32>
    %c0_8 = arith.constant 0 : index
    %c0_9 = arith.constant 0 : index
    %19 = vector.load %arg4[%c0_8, %c0_9] : memref<256x256xf32, #tpu.memory_space<vmem>>, vector<256x256xf32>
    %cst_10 = arith.constant dense<0.000000e+00> : vector<32x256xf32>
    %20 = tpu.matmul %0, %19, %cst_10 {dimension_numbers = #tpu.dot_dimension_numbers<[1], [0], [0], [1], [0, 0, 1, 1], [], []>} : vector<32x256xf32>, vector<256x256xf32>, vector<32x256xf32> -> vector<32x256xf32>
    %c0_11 = arith.constant 0 : index
    %c0_12 = arith.constant 0 : index
    %21 = vector.load %arg5[%c0_11, %c0_12] : memref<128x256xf32, #tpu.memory_space<vmem>>, vector<128x256xf32>
    %cst_13 = arith.constant dense<0.000000e+00> : vector<32x256xf32>
    %22 = tpu.matmul %18, %21, %cst_13 {dimension_numbers = #tpu.dot_dimension_numbers<[1], [0], [0], [1], [0, 0, 1, 1], [], []>} : vector<32x128xf32>, vector<128x256xf32>, vector<32x256xf32> -> vector<32x256xf32>
    %23 = arith.mulf %20, %22 : vector<32x256xf32>
    %c0_14 = arith.constant 0 : index
    %c0_15 = arith.constant 0 : index
    %24 = vector.load %arg6[%c0_14, %c0_15] : memref<32x256xf32, #tpu.memory_space<vmem>>, vector<32x256xf32>
    tpu.vector_store %arg6[%c0_14, %c0_15], %23 {strides = array<i32>} : memref<32x256xf32, #tpu.memory_space<vmem>>, vector<32x256xf32>,
    %c0_16 = arith.constant 0 : index
    %c0_17 = arith.constant 0 : index
    %25 = vector.load %arg7[%c0_16, %c0_17] : memref<32x128xf32, #tpu.memory_space<vmem>>, vector<32x128xf32>
    tpu.vector_store %arg7[%c0_16, %c0_17], %3 {strides = array<i32>} : memref<32x128xf32, #tpu.memory_space<vmem>>, vector<32x128xf32>,
    return
  }
  func.func @transform_0(%arg0: i32) -> (i32, i32) {
    %c0_i32 = arith.constant 0 : i32
    %c0_i32_0 = arith.constant 0 : i32
    return %arg0, %c0_i32 : i32, i32
  }
  func.func @transform_1(%arg0: i32) -> (i32, i32) {
    %c0_i32 = arith.constant 0 : i32
    %c0_i32_0 = arith.constant 0 : i32
    %c0_i32_1 = arith.constant 0 : i32
    return %c0_i32, %c0_i32_0 : i32, i32
  }
  func.func @transform_2(%arg0: i32) -> (i32, i32) {
    %c0_i32 = arith.constant 0 : i32
    %c0_i32_0 = arith.constant 0 : i32
    return %arg0, %c0_i32 : i32, i32
  }
  func.func @transform_3(%arg0: i32) -> (i32, i32) {
    %c0_i32 = arith.constant 0 : i32
    %c0_i32_0 = arith.constant 0 : i32
    %c0_i32_1 = arith.constant 0 : i32
    return %c0_i32, %c0_i32_0 : i32, i32
  }
  func.func @transform_4(%arg0: i32) -> (i32, i32) {
    %c0_i32 = arith.constant 0 : i32
    %c0_i32_0 = arith.constant 0 : i32
    %c0_i32_1 = arith.constant 0 : i32
    return %c0_i32, %c0_i32_0 : i32, i32
  }
  func.func @transform_5(%arg0: i32) -> (i32, i32) {
    %c0_i32 = arith.constant 0 : i32
    %c0_i32_0 = arith.constant 0 : i32
    return %arg0, %c0_i32 : i32, i32
  }
  func.func @transform_6(%arg0: i32) -> (i32, i32) {
    %c0_i32 = arith.constant 0 : i32
    %c0_i32_0 = arith.constant 0 : i32
    return %arg0, %c0_i32 : i32, i32
  }
}

</mosaic_0001>

<llo_original>
// kernel: tpu_custom_call.1
$region0: #{tpu_custom_call.1}
  #allocation0 [shape = 'u32[]', space=smem, size = 0x4, offset = 0x4, fixed_abs, tag = 'smem constant byte address 0x4 - core index']
  #allocation1 [shape = 'u32[144,128]{1,0:T(1,128)}', space=vmem, size = 0x12000, scoped, tag = 'internal scratch']
  %s0 = inlined_call_operand.hbm [shape: f32[32,256], index: 0, kind: input, shape index: {}]
  %s1 = inlined_call_operand.hbm [shape: f32[128,256], index: 1, kind: input, shape index: {}]
  %s2 = inlined_call_operand.hbm [shape: f32[32,128], index: 2, kind: input, shape index: {}]
  %s3 = inlined_call_operand.hbm [shape: f32[256,256], index: 3, kind: input, shape index: {}]
  %s4 = inlined_call_operand.hbm [shape: f32[128,256], index: 4, kind: input, shape index: {}]
  %s5 = inlined_call_operand.hbm [shape: f32[32,256], index: 5, kind: output, shape index: {0}]
  %s6 = inlined_call_operand.hbm [shape: f32[32,128], index: 6, kind: output, shape index: {1}]
  %7 = xla_tuple %s5, %s6
  %s8 = sld [smem:[#allocation0]]
  $region58: #{tpu_custom_call.1} parent=0
    _
  %s10 = ssub.s32 1, %s8
  %s11 = scalar_select 0, %s10, %s8
  $region1: #{tpu_custom_call.1} parent=0
    #allocation2 [shape = 'u8[32768]{0}', space=vmem, size = 0x8000, scoped, tag = 'input window, operand 0, single buffered']
    #allocation3 [shape = 's32[1]{0}', space=sflag, size = 0x4, scoped, tag = 'scoped memory for tpu_custom_call.1']
    #allocation4 [shape = 's32[1]{0}', space=sflag, size = 0x4, scoped, tag = 'scoped memory for tpu_custom_call.1']
    #allocation5 [shape = 'u8[131072]{0}', space=vmem, size = 0x20000, scoped, tag = 'input window, operand 1, single buffered']
    #allocation6 [shape = 's32[1]{0}', space=sflag, size = 0x4, scoped, tag = 'scoped memory for tpu_custom_call.1']
    #allocation7 [shape = 'u8[16384]{0}', space=vmem, size = 0x4000, scoped, tag = 'input window, operand 2, single buffered']
    #allocation8 [shape = 'u8[262144]{0}', space=vmem, size = 0x40000, scoped, tag = 'input window, operand 3, single buffered']
    #allocation9 [shape = 's32[1]{0}', space=sflag, size = 0x4, scoped, tag = 'scoped memory for tpu_custom_call.1']
    #allocation10 [shape = 'u8[131072]{0}', space=vmem, size = 0x20000, scoped, tag = 'input window, operand 4, single buffered']
    #allocation11 [shape = 'u8[32768]{0}', space=vmem, size = 0x8000, scoped, tag = 'output window, operand 0, single buffered']
    #allocation12 [shape = 'u8[16384]{0}', space=vmem, size = 0x4000, scoped, tag = 'output window, operand 1, single buffered']
    #allocation13 [shape = 's32[1]{0}', space=sflag, size = 0x4, scoped, tag = 'scoped memory for tpu_custom_call.1']
    %12 = vsyncpa [#allocation3], 0
    %13 = vsyncpa [#allocation6], 0
    %14 = vsyncpa [#allocation9], 0
    %15 = vsyncpa [#allocation4], 0
    %16 = vsyncpa [#allocation13], 0
    // Predicated region
    $region2: #{tpu_custom_call.1} parent=1 // pred_check
      _
    $region3: #{tpu_custom_call.1} parent=1 // pred_check_branch
      %18 = sbr.rel (0) target = $region5
    $region4: #{tpu_custom_call.1} parent=1 // pred_region
      %s20 = ssub.s32 1024, 1024
      %21 = vsyncadd [#allocation3], %s20
      %s22 = sshll.u32 [#allocation2], 4
      %s23 = int_to_ptr.vmem [resolvable:$true] %s22
      %28 = dma.hbm_to_vmem [thread:$0]  %s0, 1024, %s23, [#allocation3], 256, 256, 16
    $region5: #{tpu_custom_call.1} parent=1 // pred_fallthru
      _
    // Predicated region
    $region6: #{tpu_custom_call.1} parent=1 // pred_check
      _
    $region7: #{tpu_custom_call.1} parent=1 // pred_check_branch
      %30 = sbr.rel (0) target = $region9
    $region8: #{tpu_custom_call.1} parent=1 // pred_region
      %s32 = ssub.s32 4096, 4096
      %33 = vsyncadd [#allocation6], %s32
      %s34 = sshll.u32 [#allocation5], 4
      %s35 = int_to_ptr.vmem [resolvable:$true] %s34
      %40 = dma.hbm_to_vmem [thread:$0]  %s1, 4096, %s35, [#allocation6], 256, 256, 16
    $region9: #{tpu_custom_call.1} parent=1 // pred_fallthru
      _
    // Predicated region
    $region10: #{tpu_custom_call.1} parent=1 // pred_check
      _
    $region11: #{tpu_custom_call.1} parent=1 // pred_check_branch
      %42 = sbr.rel (0) target = $region13
    $region12: #{tpu_custom_call.1} parent=1 // pred_region
      %s44 = ssub.s32 512, 512
      %45 = vsyncadd [#allocation6], %s44
      %s46 = sshll.u32 [#allocation7], 4
      %s47 = int_to_ptr.vmem [resolvable:$true] %s46
      %52 = dma.hbm_to_vmem [thread:$0]  %s2, 512, %s47, [#allocation6], 128, 128, 8
    $region13: #{tpu_custom_call.1} parent=1 // pred_fallthru
      _
    // Predicated region
    $region14: #{tpu_custom_call.1} parent=1 // pred_check
      _
    $region15: #{tpu_custom_call.1} parent=1 // pred_check_branch
      %54 = sbr.rel (0) target = $region17
    $region16: #{tpu_custom_call.1} parent=1 // pred_region
      %s56 = ssub.s32 8192, 8192
      %57 = vsyncadd [#allocation9], %s56
      %s58 = sshll.u32 [#allocation8], 4
      %s59 = int_to_ptr.vmem [resolvable:$true] %s58
      %64 = dma.hbm_to_vmem [thread:$0]  %s3, 8192, %s59, [#allocation9], 256, 256, 16
    $region17: #{tpu_custom_call.1} parent=1 // pred_fallthru
      _
    // Predicated region
    $region18: #{tpu_custom_call.1} parent=1 // pred_check
      _
    $region19: #{tpu_custom_call.1} parent=1 // pred_check_branch
      %66 = sbr.rel (0) target = $region21
    $region20: #{tpu_custom_call.1} parent=1 // pred_region
      %s68 = ssub.s32 4096, 4096
      %69 = vsyncadd [#allocation9], %s68
      %s70 = sshll.u32 [#allocation10], 4
      %s71 = int_to_ptr.vmem [resolvable:$true] %s70
      %76 = dma.hbm_to_vmem [thread:$0]  %s4, 4096, %s71, [#allocation9], 256, 256, 16
    $region21: #{tpu_custom_call.1} parent=1 // pred_fallthru
      _
    // Predicated region
    $region22: #{tpu_custom_call.1} parent=1 // pred_check
      _
    $region23: #{tpu_custom_call.1} parent=1 // pred_check_branch
      %78 = sbr.rel (0) target = $region25
    $region24: #{tpu_custom_call.1} parent=1 // pred_region
      %79 = dma.done [#allocation3], 1024
    $region25: #{tpu_custom_call.1} parent=1 // pred_fallthru
      _
    // Predicated region
    $region26: #{tpu_custom_call.1} parent=1 // pred_check
      _
    $region27: #{tpu_custom_call.1} parent=1 // pred_check_branch
      %81 = sbr.rel (0) target = $region29
    $region28: #{tpu_custom_call.1} parent=1 // pred_region
      %82 = dma.done [#allocation6], 4096
    $region29: #{tpu_custom_call.1} parent=1 // pred_fallthru
      _
    // Predicated region
    $region30: #{tpu_custom_call.1} parent=1 // pred_check
      _
    $region31: #{tpu_custom_call.1} parent=1 // pred_check_branch
      %84 = sbr.rel (0) target = $region33
    $region32: #{tpu_custom_call.1} parent=1 // pred_region
      %85 = dma.done [#allocation6], 512
    $region33: #{tpu_custom_call.1} parent=1 // pred_fallthru
      _
    // Predicated region
    $region34: #{tpu_custom_call.1} parent=1 // pred_check
      _
    $region35: #{tpu_custom_call.1} parent=1 // pred_check_branch
      %87 = sbr.rel (0) target = $region37
    $region36: #{tpu_custom_call.1} parent=1 // pred_region
      %88 = dma.done [#allocation9], 8192
    $region37: #{tpu_custom_call.1} parent=1 // pred_fallthru
      _
    // Predicated region
    $region38: #{tpu_custom_call.1} parent=1 // pred_check
      _
    $region39: #{tpu_custom_call.1} parent=1 // pred_check_branch
      %90 = sbr.rel (0) target = $region41
    $region40: #{tpu_custom_call.1} parent=1 // pred_region
      %91 = dma.done [#allocation9], 4096
    $region41: #{tpu_custom_call.1} parent=1 // pred_fallthru
      _
    %v92 = vld [vmem:[#allocation2] sm:$0xff]
    %v93 = vld [vmem:[#allocation2 + $0x8] sm:$0xff]
    %v94 = vld [vmem:[#allocation2 + $0x10] sm:$0xff]
    %v95 = vld [vmem:[#allocation2 + $0x18] sm:$0xff]
    %v96 = vld [vmem:[#allocation2 + $0x20] sm:$0xff]
    %v97 = vld [vmem:[#allocation2 + $0x28] sm:$0xff]
    %v98 = vld [vmem:[#allocation2 + $0x30] sm:$0xff]
    %v99 = vld [vmem:[#allocation2 + $0x38] sm:$0xff]
    %v100 = vld [vmem:[#allocation5] sm:$0xff]
    %v101 = vld [vmem:[#allocation5 + $0x8] sm:$0xff]
    %v102 = vld [vmem:[#allocation5 + $0x10] sm:$0xff]
    %v103 = vld [vmem:[#allocation5 + $0x18] sm:$0xff]
    %v104 = vld [vmem:[#allocation5 + $0x20] sm:$0xff]
    %v105 = vld [vmem:[#allocation5 + $0x28] sm:$0xff]
    %v106 = vld [vmem:[#allocation5 + $0x30] sm:$0xff]
    %v107 = vld [vmem:[#allocation5 + $0x38] sm:$0xff]
    %v108 = vld [vmem:[#allocation5 + $0x40] sm:$0xff]
    %v109 = vld [vmem:[#allocation5 + $0x48] sm:$0xff]
    %v110 = vld [vmem:[#allocation5 + $0x50] sm:$0xff]
    %v111 = vld [vmem:[#allocation5 + $0x58] sm:$0xff]
    %v112 = vld [vmem:[#allocation5 + $0x60] sm:$0xff]
    %v113 = vld [vmem:[#allocation5 + $0x68] sm:$0xff]
    %v114 = vld [vmem:[#allocation5 + $0x70] sm:$0xff]
    %v115 = vld [vmem:[#allocation5 + $0x78] sm:$0xff]
    %v116 = vld [vmem:[#allocation5 + $0x80] sm:$0xff]
    %v117 = vld [vmem:[#allocation5 + $0x88] sm:$0xff]
    %v118 = vld [vmem:[#allocation5 + $0x90] sm:$0xff]
    %v119 = vld [vmem:[#allocation5 + $0x98] sm:$0xff]
    %v120 = vld [vmem:[#allocation5 + $0xa0] sm:$0xff]
    %v121 = vld [vmem:[#allocation5 + $0xa8] sm:$0xff]
    %v122 = vld [vmem:[#allocation5 + $0xb0] sm:$0xff]
    %v123 = vld [vmem:[#allocation5 + $0xb8] sm:$0xff]
    %v124 = vld [vmem:[#allocation5 + $0xc0] sm:$0xff]
    %v125 = vld [vmem:[#allocation5 + $0xc8] sm:$0xff]
    %v126 = vld [vmem:[#allocation5 + $0xd0] sm:$0xff]
    %v127 = vld [vmem:[#allocation5 + $0xd8] sm:$0xff]
    %v128 = vld [vmem:[#allocation5 + $0xe0] sm:$0xff]
    %v129 = vld [vmem:[#allocation5 + $0xe8] sm:$0xff]
    %v130 = vld [vmem:[#allocation5 + $0xf0] sm:$0xff]
    %v131 = vld [vmem:[#allocation5 + $0xf8] sm:$0xff]
    %v132 = vld [vmem:[#allocation7] sm:$0xff]
    %v133 = vld [vmem:[#allocation7 + $0x8] sm:$0xff]
    %v134 = vld [vmem:[#allocation7 + $0x10] sm:$0xff]
    %v135 = vld [vmem:[#allocation7 + $0x18] sm:$0xff]
    %136 = vmatprep.subr.mxu0 %v101
    %137 = vmatpush1.xpose.msra.mxu0 %v100
    %138 = vmatprep.subr.mxu0 %v103
    %139 = vmatpush1.xpose.msra.mxu0 %v102
    %140 = vmatprep.subr.mxu0 %v105
    %141 = vmatpush1.xpose.msra.mxu0 %v104
    %142 = vmatprep.subr.mxu0 %v107
    %143 = vmatpush1.xpose.msra.mxu0 %v106
    %144 = vmatprep.subr.mxu0 %v109
    %145 = vmatpush1.xpose.msra.mxu0 %v108
    %146 = vmatprep.subr.mxu0 %v111
    %147 = vmatpush1.xpose.msra.mxu0 %v110
    %148 = vmatprep.subr.mxu0 %v113
    %149 = vmatpush1.xpose.msra.mxu0 %v112
    %150 = vmatprep.subr.mxu0 %v115
    %151 = vmatpush1.xpose.msra.mxu0 %v114
    %152 = vmatprep.subr.mxu0 %v117
    %153 = vmatpush1.xpose.msra.mxu0 %v116
    %154 = vmatprep.subr.mxu0 %v119
    %155 = vmatpush1.xpose.msra.mxu0 %v118
    %156 = vmatprep.subr.mxu0 %v121
    %157 = vmatpush1.xpose.msra.mxu0 %v120
    %158 = vmatprep.subr.mxu0 %v123
    %159 = vmatpush1.xpose.msra.mxu0 %v122
    %160 = vmatprep.subr.mxu0 %v125
    %161 = vmatpush1.xpose.msra.mxu0 %v124
    %162 = vmatprep.subr.mxu0 %v127
    %163 = vmatpush1.xpose.msra.mxu0 %v126
    %164 = vmatprep.subr.mxu0 %v129
    %165 = vmatpush1.xpose.msra.mxu0 %v128
    %166 = vmatprep.subr.mxu0 %v131
    %167 = vmatpush1.xpose.msra.mxu0 %v130
    %168 = vmatprep.subr.mxu0 0.0
    %169 = vmatpush1.xpose.msra.mxu0 0.0
    %170 = vmatprep.subr.mxu0 0.0
    %171 = vmatpush1.xpose.msra.mxu0 0.0
    %172 = vmatprep.subr.mxu0 0.0
    %173 = vmatpush1.xpose.msra.mxu0 0.0
    %174 = vmatprep.subr.mxu0 0.0
    %175 = vmatpush1.xpose.msra.mxu0 0.0
    %176 = vmatprep.subr.mxu0 0.0
    %177 = vmatpush1.xpose.msra.mxu0 0.0
    %178 = vmatprep.subr.mxu0 0.0
    %179 = vmatpush1.xpose.msra.mxu0 0.0
    %180 = vmatprep.subr.mxu0 0.0
    %181 = vmatpush1.xpose.msra.mxu0 0.0
    %182 = vmatprep.subr.mxu0 0.0
    %183 = vmatpush1.xpose.msra.mxu0 0.0
    %184 = vmatprep.subr.mxu0 0.0
    %185 = vmatpush1.xpose.msra.mxu0 0.0
    %186 = vmatprep.subr.mxu0 0.0
    %187 = vmatpush1.xpose.msra.mxu0 0.0
    %188 = vmatprep.subr.mxu0 0.0
    %189 = vmatpush1.xpose.msra.mxu0 0.0
    %190 = vmatprep.subr.mxu0 0.0
    %191 = vmatpush1.xpose.msra.mxu0 0.0
    %192 = vmatprep.subr.mxu0 0.0
    %193 = vmatpush1.xpose.msra.mxu0 0.0
    %194 = vmatprep.subr.mxu0 0.0
    %195 = vmatpush1.xpose.msra.mxu0 0.0
    %196 = vmatprep.subr.mxu0 0.0
    %197 = vmatpush1.xpose.msra.mxu0 0.0
    %198 = vmatprep.subr.mxu0 0.0
    %199 = vmatpush1.xpose.msra.mxu0 0.0
    %200 = vmatprep.mubr.f32.mxu0 %v93
    %201 = vmatmul.mubr.f32.gmra.mrb[0].mxu0 %v92
    %v202 = vpop.f32.mrb[0].mxu0
    %v203 = vadd.f32 0.0, %v202
    %v204 = vpop.f32.mrb[0].mxu0
    %205 = vmatprep.mubr.f32.mxu0 %v95
    %206 = vmatmul.mubr.f32.gmra.mrb[0].mxu0 %v94
    %v207 = vpop.f32.mrb[0].mxu0
    %v208 = vadd.f32 0.0, %v207
    %v209 = vpop.f32.mrb[0].mxu0
    %210 = vmatprep.mubr.f32.mxu0 %v97
    %211 = vmatmul.mubr.f32.gmra.mrb[0].mxu0 %v96
    %v212 = vpop.f32.mrb[0].mxu0
    %v213 = vadd.f32 0.0, %v212
    %v214 = vpop.f32.mrb[0].mxu0
    %215 = vmatprep.mubr.f32.mxu0 %v99
    %216 = vmatmul.mubr.f32.gmra.mrb[0].mxu0 %v98
    %v217 = vpop.f32.mrb[0].mxu0
    %v218 = vadd.f32 0.0, %v217
    %v219 = vpop.f32.mrb[0].mxu0
    %220 = vdwg.mxu0
    %v221 = vlaneseq
    %v222 = vand.u32 %v221, 127
    %vm223 = vcmp.lt.s32.totalorder %v222, 4
    %v224 = vsel %vm223, %v203, -inf
    %v225 = vsel %vm223, %v208, -inf
    %v226 = vsel %vm223, %v213, -inf
    %v227 = vsel %vm223, %v218, -inf
    %228 = vmax.xlane.f32.xlu0 %v224
    %v229 = vpop.xlane.xlu0 %228
    %230 = vmax.xlane.f32.xlu0 %v225
    %v231 = vpop.xlane.xlu0 %230
    %232 = vmax.xlane.f32.xlu0 %v226
    %v233 = vpop.xlane.xlu0 %232
    %234 = vmax.xlane.f32.xlu0 %v227
    %v235 = vpop.xlane.xlu0 %234
    %v236 = vsub.f32 %v224, %v229
    %v237 = vsub.f32 %v225, %v231
    %v238 = vsub.f32 %v226, %v233
    %v239 = vsub.f32 %v227, %v235
    %v240 = vmul.f32 %v236, 1.442695
    %v241 = vpow.pop %v240
    %v242 = vmul.f32 %v237, 1.442695
    %v243 = vpow.pop %v242
    %v244 = vmul.f32 %v238, 1.442695
    %v245 = vpow.pop %v244
    %v246 = vmul.f32 %v239, 1.442695
    %v247 = vpow.pop %v246
    %248 = vadd.xlane.f32.xlu0 %v241
    %v249 = vpop.xlane.xlu0 %248
    %250 = vadd.xlane.f32.xlu0 %v243
    %v251 = vpop.xlane.xlu0 %250
    %252 = vadd.xlane.f32.xlu0 %v245
    %v253 = vpop.xlane.xlu0 %252
    %254 = vadd.xlane.f32.xlu0 %v247
    %v255 = vpop.xlane.xlu0 %254
    %v256 = vrcp.pop %v249
    %v257 = vmul.f32 %v241, %v256
    %v258 = vrcp.pop %v251
    %v259 = vmul.f32 %v243, %v258
    %v260 = vrcp.pop %v253
    %v261 = vmul.f32 %v245, %v260
    %v262 = vrcp.pop %v255
    %v263 = vmul.f32 %v247, %v262
    %v264 = vsub.f32 %v257, %v132
    %v265 = vsub.f32 %v259, %v133
    %v266 = vsub.f32 %v261, %v134
    %v267 = vsub.f32 %v263, %v135
    %v268 = vld [vmem:[#allocation8] sm:$0xff]
    %v269 = vld [vmem:[#allocation8 + $0x8] sm:$0xff]
    %v270 = vld [vmem:[#allocation8 + $0x10] sm:$0xff]
    %v271 = vld [vmem:[#allocation8 + $0x18] sm:$0xff]
    %v272 = vld [vmem:[#allocation8 + $0x20] sm:$0xff]
    %v273 = vld [vmem:[#allocation8 + $0x28] sm:$0xff]
    %v274 = vld [vmem:[#allocation8 + $0x30] sm:$0xff]
    %v275 = vld [vmem:[#allocation8 + $0x38] sm:$0xff]
    %v276 = vld [vmem:[#allocation8 + $0x40] sm:$0xff]
    %v277 = vld [vmem:[#allocation8 + $0x48] sm:$0xff]
    %v278 = vld [vmem:[#allocation8 + $0x50] sm:$0xff]
    %v279 = vld [vmem:[#allocation8 + $0x58] sm:$0xff]
    %v280 = vld [vmem:[#allocation8 + $0x60] sm:$0xff]
    %v281 = vld [vmem:[#allocation8 + $0x68] sm:$0xff]
    %v282 = vld [vmem:[#allocation8 + $0x70] sm:$0xff]
    %v283 = vld [vmem:[#allocation8 + $0x78] sm:$0xff]
    %v284 = vld [vmem:[#allocation8 + $0x80] sm:$0xff]
    %v285 = vld [vmem:[#allocation8 + $0x88] sm:$0xff]
    %v286 = vld [vmem:[#allocation8 + $0x90] sm:$0xff]
    %v287 = vld [vmem:[#allocation8 + $0x98] sm:$0xff]
    %v288 = vld [vmem:[#allocation8 + $0xa0] sm:$0xff]
    %v289 = vld [vmem:[#allocation8 + $0xa8] sm:$0xff]
    %v290 = vld [vmem:[#allocation8 + $0xb0] sm:$0xff]
    %v291 = vld [vmem:[#allocation8 + $0xb8] sm:$0xff]
    %v292 = vld [vmem:[#allocation8 + $0xc0] sm:$0xff]
    %v293 = vld [vmem:[#allocation8 + $0xc8] sm:$0xff]
    %v294 = vld [vmem:[#allocation8 + $0xd0] sm:$0xff]
    %v295 = vld [vmem:[#allocation8 + $0xd8] sm:$0xff]
    %v296 = vld [vmem:[#allocation8 + $0xe0] sm:$0xff]
    %v297 = vld [vmem:[#allocation8 + $0xe8] sm:$0xff]
    %v298 = vld [vmem:[#allocation8 + $0xf0] sm:$0xff]
    %v299 = vld [vmem:[#allocation8 + $0xf8] sm:$0xff]
    %v300 = vld [vmem:[#allocation8 + $0x100] sm:$0xff]
    %v301 = vld [vmem:[#allocation8 + $0x108] sm:$0xff]
    %v302 = vld [vmem:[#allocation8 + $0x110] sm:$0xff]
    %v303 = vld [vmem:[#allocation8 + $0x118] sm:$0xff]
    %v304 = vld [vmem:[#allocation8 + $0x120] sm:$0xff]
    %v305 = vld [vmem:[#allocation8 + $0x128] sm:$0xff]
    %v306 = vld [vmem:[#allocation8 + $0x130] sm:$0xff]
    %v307 = vld [vmem:[#allocation8 + $0x138] sm:$0xff]
    %v308 = vld [vmem:[#allocation8 + $0x140] sm:$0xff]
    %v309 = vld [vmem:[#allocation8 + $0x148] sm:$0xff]
    %v310 = vld [vmem:[#allocation8 + $0x150] sm:$0xff]
    %v311 = vld [vmem:[#allocation8 + $0x158] sm:$0xff]
    %v312 = vld [vmem:[#allocation8 + $0x160] sm:$0xff]
    %v313 = vld [vmem:[#allocation8 + $0x168] sm:$0xff]
    %v314 = vld [vmem:[#allocation8 + $0x170] sm:$0xff]
    %v315 = vld [vmem:[#allocation8 + $0x178] sm:$0xff]
    %v316 = vld [vmem:[#allocation8 + $0x180] sm:$0xff]
    %v317 = vld [vmem:[#allocation8 + $0x188] sm:$0xff]
    %v318 = vld [vmem:[#allocation8 + $0x190] sm:$0xff]
    %v319 = vld [vmem:[#allocation8 + $0x198] sm:$0xff]
    %v320 = vld [vmem:[#allocation8 + $0x1a0] sm:$0xff]
    %v321 = vld [vmem:[#allocation8 + $0x1a8] sm:$0xff]
    %v322 = vld [vmem:[#allocation8 + $0x1b0] sm:$0xff]
    %v323 = vld [vmem:[#allocation8 + $0x1b8] sm:$0xff]
    %v324 = vld [vmem:[#allocation8 + $0x1c0] sm:$0xff]
    %v325 = vld [vmem:[#allocation8 + $0x1c8] sm:$0xff]
    %v326 = vld [vmem:[#allocation8 + $0x1d0] sm:$0xff]
    %v327 = vld [vmem:[#allocation8 + $0x1d8] sm:$0xff]
    %v328 = vld [vmem:[#allocation8 + $0x1e0] sm:$0xff]
    %v329 = vld [vmem:[#allocation8 + $0x1e8] sm:$0xff]
    %v330 = vld [vmem:[#allocation8 + $0x1f0] sm:$0xff]
    %v331 = vld [vmem:[#allocation8 + $0x1f8] sm:$0xff]
    %332 = vmatprep.subr.mxu0 %v269
    %333 = vmatpush1.msra.mxu0 %v268
    %334 = vmatprep.subr.mxu0 %v271
    %335 = vmatpush1.msra.mxu0 %v270
    %336 = vmatprep.subr.mxu0 %v273
    %337 = vmatpush1.msra.mxu0 %v272
    %338 = vmatprep.subr.mxu0 %v275
    %339 = vmatpush1.msra.mxu0 %v274
    %340 = vmatprep.subr.mxu0 %v277
    %341 = vmatpush1.msra.mxu0 %v276
    %342 = vmatprep.subr.mxu0 %v279
    %343 = vmatpush1.msra.mxu0 %v278
    %344 = vmatprep.subr.mxu0 %v281
    %345 = vmatpush1.msra.mxu0 %v280
    %346 = vmatprep.subr.mxu0 %v283
    %347 = vmatpush1.msra.mxu0 %v282
    %348 = vmatprep.subr.mxu0 %v285
    %349 = vmatpush1.msra.mxu0 %v284
    %350 = vmatprep.subr.mxu0 %v287
    %351 = vmatpush1.msra.mxu0 %v286
    %352 = vmatprep.subr.mxu0 %v289
    %353 = vmatpush1.msra.mxu0 %v288
    %354 = vmatprep.subr.mxu0 %v291
    %355 = vmatpush1.msra.mxu0 %v290
    %356 = vmatprep.subr.mxu0 %v293
    %357 = vmatpush1.msra.mxu0 %v292
    %358 = vmatprep.subr.mxu0 %v295
    %359 = vmatpush1.msra.mxu0 %v294
    %360 = vmatprep.subr.mxu0 %v297
    %361 = vmatpush1.msra.mxu0 %v296
    %362 = vmatprep.subr.mxu0 %v299
    %363 = vmatpush1.msra.mxu0 %v298
    %364 = vmatprep.subr.mxu0 %v301
    %365 = vmatpush1.msra.mxu0 %v300
    %366 = vmatprep.subr.mxu0 %v303
    %367 = vmatpush1.msra.mxu0 %v302
    %368 = vmatprep.subr.mxu0 %v305
    %369 = vmatpush1.msra.mxu0 %v304
    %370 = vmatprep.subr.mxu0 %v307
    %371 = vmatpush1.msra.mxu0 %v306
    %372 = vmatprep.subr.mxu0 %v309
    %373 = vmatpush1.msra.mxu0 %v308
    %374 = vmatprep.subr.mxu0 %v311
    %375 = vmatpush1.msra.mxu0 %v310
    %376 = vmatprep.subr.mxu0 %v313
    %377 = vmatpush1.msra.mxu0 %v312
    %378 = vmatprep.subr.mxu0 %v315
    %379 = vmatpush1.msra.mxu0 %v314
    %380 = vmatprep.subr.mxu0 %v317
    %381 = vmatpush1.msra.mxu0 %v316
    %382 = vmatprep.subr.mxu0 %v319
    %383 = vmatpush1.msra.mxu0 %v318
    %384 = vmatprep.subr.mxu0 %v321
    %385 = vmatpush1.msra.mxu0 %v320
    %386 = vmatprep.subr.mxu0 %v323
    %387 = vmatpush1.msra.mxu0 %v322
    %388 = vmatprep.subr.mxu0 %v325
    %389 = vmatpush1.msra.mxu0 %v324
    %390 = vmatprep.subr.mxu0 %v327
    %391 = vmatpush1.msra.mxu0 %v326
    %392 = vmatprep.subr.mxu0 %v329
    %393 = vmatpush1.msra.mxu0 %v328
    %394 = vmatprep.subr.mxu0 %v331
    %395 = vmatpush1.msra.mxu0 %v330
    %396 = vmatprep.mubr.f32.mxu0 %v93
    %397 = vmatmul.mubr.f32.gmra.mrb[0].mxu0 %v92
    %v398 = vpop.f32.mrb[0].mxu0
    %v399 = vadd.f32 0.0, %v398
    %v400 = vpop.f32.mrb[0].mxu0
    %v401 = vadd.f32 0.0, %v400
    %402 = vmatprep.mubr.f32.mxu0 %v95
    %403 = vmatmul.mubr.f32.gmra.mrb[0].mxu0 %v94
    %v404 = vpop.f32.mrb[0].mxu0
    %v405 = vadd.f32 0.0, %v404
    %v406 = vpop.f32.mrb[0].mxu0
    %v407 = vadd.f32 0.0, %v406
    %408 = vmatprep.mubr.f32.mxu0 %v97
    %409 = vmatmul.mubr.f32.gmra.mrb[0].mxu0 %v96
    %v410 = vpop.f32.mrb[0].mxu0
    %v411 = vadd.f32 0.0, %v410
    %v412 = vpop.f32.mrb[0].mxu0
    %v413 = vadd.f32 0.0, %v412
    %414 = vmatprep.mubr.f32.mxu0 %v99
    %415 = vmatmul.mubr.f32.gmra.mrb[0].mxu0 %v98
    %v416 = vpop.f32.mrb[0].mxu0
    %v417 = vadd.f32 0.0, %v416
    %v418 = vpop.f32.mrb[0].mxu0
    %v419 = vadd.f32 0.0, %v418
    %420 = vdwg.mxu0
    %v421 = vld [vmem:[#allocation10] sm:$0xff]
    %v422 = vld [vmem:[#allocation10 + $0x8] sm:$0xff]
    %v423 = vld [vmem:[#allocation10 + $0x10] sm:$0xff]
    %v424 = vld [vmem:[#allocation10 + $0x18] sm:$0xff]
    %v425 = vld [vmem:[#allocation10 + $0x20] sm:$0xff]
    %v426 = vld [vmem:[#allocation10 + $0x28] sm:$0xff]
    %v427 = vld [vmem:[#allocation10 + $0x30] sm:$0xff]
    %v428 = vld [vmem:[#allocation10 + $0x38] sm:$0xff]
    %v429 = vld [vmem:[#allocation10 + $0x40] sm:$0xff]
    %v430 = vld [vmem:[#allocation10 + $0x48] sm:$0xff]
    %v431 = vld [vmem:[#allocation10 + $0x50] sm:$0xff]
    %v432 = vld [vmem:[#allocation10 + $0x58] sm:$0xff]
    %v433 = vld [vmem:[#allocation10 + $0x60] sm:$0xff]
    %v434 = vld [vmem:[#allocation10 + $0x68] sm:$0xff]
    %v435 = vld [vmem:[#allocation10 + $0x70] sm:$0xff]
    %v436 = vld [vmem:[#allocation10 + $0x78] sm:$0xff]
    %v437 = vld [vmem:[#allocation10 + $0x80] sm:$0xff]
    %v438 = vld [vmem:[#allocation10 + $0x88] sm:$0xff]
    %v439 = vld [vmem:[#allocation10 + $0x90] sm:$0xff]
    %v440 = vld [vmem:[#allocation10 + $0x98] sm:$0xff]
    %v441 = vld [vmem:[#allocation10 + $0xa0] sm:$0xff]
    %v442 = vld [vmem:[#allocation10 + $0xa8] sm:$0xff]
    %v443 = vld [vmem:[#allocation10 + $0xb0] sm:$0xff]
    %v444 = vld [vmem:[#allocation10 + $0xb8] sm:$0xff]
    %v445 = vld [vmem:[#allocation10 + $0xc0] sm:$0xff]
    %v446 = vld [vmem:[#allocation10 + $0xc8] sm:$0xff]
    %v447 = vld [vmem:[#allocation10 + $0xd0] sm:$0xff]
    %v448 = vld [vmem:[#allocation10 + $0xd8] sm:$0xff]
    %v449 = vld [vmem:[#allocation10 + $0xe0] sm:$0xff]
    %v450 = vld [vmem:[#allocation10 + $0xe8] sm:$0xff]
    %v451 = vld [vmem:[#allocation10 + $0xf0] sm:$0xff]
    %v452 = vld [vmem:[#allocation10 + $0xf8] sm:$0xff]
    %453 = vmatprep.subr.mxu0 %v422
    %454 = vmatpush1.msra.mxu0 %v421
    %455 = vmatprep.subr.mxu0 %v424
    %456 = vmatpush1.msra.mxu0 %v423
    %457 = vmatprep.subr.mxu0 %v426
    %458 = vmatpush1.msra.mxu0 %v425
    %459 = vmatprep.subr.mxu0 %v428
    %460 = vmatpush1.msra.mxu0 %v427
    %461 = vmatprep.subr.mxu0 %v430
    %462 = vmatpush1.msra.mxu0 %v429
    %463 = vmatprep.subr.mxu0 %v432
    %464 = vmatpush1.msra.mxu0 %v431
    %465 = vmatprep.subr.mxu0 %v434
    %466 = vmatpush1.msra.mxu0 %v433
    %467 = vmatprep.subr.mxu0 %v436
    %468 = vmatpush1.msra.mxu0 %v435
    %469 = vmatprep.subr.mxu0 %v438
    %470 = vmatpush1.msra.mxu0 %v437
    %471 = vmatprep.subr.mxu0 %v440
    %472 = vmatpush1.msra.mxu0 %v439
    %473 = vmatprep.subr.mxu0 %v442
    %474 = vmatpush1.msra.mxu0 %v441
    %475 = vmatprep.subr.mxu0 %v444
    %476 = vmatpush1.msra.mxu0 %v443
    %477 = vmatprep.subr.mxu0 %v446
    %478 = vmatpush1.msra.mxu0 %v445
    %479 = vmatprep.subr.mxu0 %v448
    %480 = vmatpush1.msra.mxu0 %v447
    %481 = vmatprep.subr.mxu0 %v450
    %482 = vmatpush1.msra.mxu0 %v449
    %483 = vmatprep.subr.mxu0 %v452
    %484 = vmatpush1.msra.mxu0 %v451
    %485 = vmatprep.subr.mxu0 0.0
    %486 = vmatpush1.msra.mxu0 0.0
    %487 = vmatprep.subr.mxu0 0.0
    %488 = vmatpush1.msra.mxu0 0.0
    %489 = vmatprep.subr.mxu0 0.0
    %490 = vmatpush1.msra.mxu0 0.0
    %491 = vmatprep.subr.mxu0 0.0
    %492 = vmatpush1.msra.mxu0 0.0
    %493 = vmatprep.subr.mxu0 0.0
    %494 = vmatpush1.msra.mxu0 0.0
    %495 = vmatprep.subr.mxu0 0.0
    %496 = vmatpush1.msra.mxu0 0.0
    %497 = vmatprep.subr.mxu0 0.0
    %498 = vmatpush1.msra.mxu0 0.0
    %499 = vmatprep.subr.mxu0 0.0
    %500 = vmatpush1.msra.mxu0 0.0
    %501 = vmatprep.subr.mxu0 0.0
    %502 = vmatpush1.msra.mxu0 0.0
    %503 = vmatprep.subr.mxu0 0.0
    %504 = vmatpush1.msra.mxu0 0.0
    %505 = vmatprep.subr.mxu0 0.0
    %506 = vmatpush1.msra.mxu0 0.0
    %507 = vmatprep.subr.mxu0 0.0
    %508 = vmatpush1.msra.mxu0 0.0
    %509 = vmatprep.subr.mxu0 0.0
    %510 = vmatpush1.msra.mxu0 0.0
    %511 = vmatprep.subr.mxu0 0.0
    %512 = vmatpush1.msra.mxu0 0.0
    %513 = vmatprep.subr.mxu0 0.0
    %514 = vmatpush1.msra.mxu0 0.0
    %515 = vmatprep.subr.mxu0 0.0
    %516 = vmatpush1.msra.mxu0 0.0
    %517 = vmatprep.mubr.f32.mxu0 0.0
    %518 = vmatmul.mubr.f32.gmra.mrb[0].mxu0 %v264
    %v519 = vpop.f32.mrb[0].mxu0
    %v520 = vadd.f32 0.0, %v519
    %v521 = vpop.f32.mrb[0].mxu0
    %v522 = vadd.f32 0.0, %v521
    %523 = vmatprep.mubr.f32.mxu0 0.0
    %524 = vmatmul.mubr.f32.gmra.mrb[0].mxu0 %v265
    %v525 = vpop.f32.mrb[0].mxu0
    %v526 = vadd.f32 0.0, %v525
    %v527 = vpop.f32.mrb[0].mxu0
    %v528 = vadd.f32 0.0, %v527
    %529 = vmatprep.mubr.f32.mxu0 0.0
    %530 = vmatmul.mubr.f32.gmra.mrb[0].mxu0 %v266
    %v531 = vpop.f32.mrb[0].mxu0
    %v532 = vadd.f32 0.0, %v531
    %v533 = vpop.f32.mrb[0].mxu0
    %v534 = vadd.f32 0.0, %v533
    %535 = vmatprep.mubr.f32.mxu0 0.0
    %536 = vmatmul.mubr.f32.gmra.mrb[0].mxu0 %v267
    %v537 = vpop.f32.mrb[0].mxu0
    %v538 = vadd.f32 0.0, %v537
    %v539 = vpop.f32.mrb[0].mxu0
    %v540 = vadd.f32 0.0, %v539
    %541 = vdwg.mxu0
    %v542 = vmul.f32 %v399, %v520
    %v543 = vmul.f32 %v401, %v522
    %v544 = vmul.f32 %v405, %v526
    %v545 = vmul.f32 %v407, %v528
    %v546 = vmul.f32 %v411, %v532
    %v547 = vmul.f32 %v413, %v534
    %v548 = vmul.f32 %v417, %v538
    %v549 = vmul.f32 %v419, %v540
    %550 = vst [vmem:[#allocation11] sm:$0xff] %v542
    %551 = vst [vmem:[#allocation11 + $0x8] sm:$0xff] %v543
    %552 = vst [vmem:[#allocation11 + $0x10] sm:$0xff] %v544
    %553 = vst [vmem:[#allocation11 + $0x18] sm:$0xff] %v545
    %554 = vst [vmem:[#allocation11 + $0x20] sm:$0xff] %v546
    %555 = vst [vmem:[#allocation11 + $0x28] sm:$0xff] %v547
    %556 = vst [vmem:[#allocation11 + $0x30] sm:$0xff] %v548
    %557 = vst [vmem:[#allocation11 + $0x38] sm:$0xff] %v549
    %558 = vst [vmem:[#allocation12] sm:$0xff] %v203
    %559 = vst [vmem:[#allocation12 + $0x8] sm:$0xff] %v208
    %560 = vst [vmem:[#allocation12 + $0x10] sm:$0xff] %v213
    %561 = vst [vmem:[#allocation12 + $0x18] sm:$0xff] %v218
    // Predicated region
    $region42: #{tpu_custom_call.1} parent=1 // pred_check
      _
    $region43: #{tpu_custom_call.1} parent=1 // pred_check_branch
      %563 = sbr.rel (0) target = $region45
    $region44: #{tpu_custom_call.1} parent=1 // pred_region
      %s565 = ssub.s32 1024, 1024
      %566 = vsyncadd [#allocation4], %s565
      %s567 = sshll.u32 [#allocation11], 4
      %s568 = int_to_ptr.vmem [resolvable:$true] %s567
      %573 = dma.vmem_to_hbm [thread:$0]  %s568, 1024, %s5, [#allocation4], 256, 256, 16
    $region45: #{tpu_custom_call.1} parent=1 // pred_fallthru
      _
    // Predicated region
    $region46: #{tpu_custom_call.1} parent=1 // pred_check
      _
    $region47: #{tpu_custom_call.1} parent=1 // pred_check_branch
      %575 = sbr.rel (0) target = $region49
    $region48: #{tpu_custom_call.1} parent=1 // pred_region
      %s577 = ssub.s32 512, 512
      %578 = vsyncadd [#allocation13], %s577
      %s579 = sshll.u32 [#allocation12], 4
      %s580 = int_to_ptr.vmem [resolvable:$true] %s579
      %585 = dma.vmem_to_hbm [thread:$0]  %s580, 512, %s6, [#allocation13], 128, 128, 8
    $region49: #{tpu_custom_call.1} parent=1 // pred_fallthru
      _
    // Predicated region
    $region50: #{tpu_custom_call.1} parent=1 // pred_check
      _
    $region51: #{tpu_custom_call.1} parent=1 // pred_check_branch
      %587 = sbr.rel (0) target = $region53
    $region52: #{tpu_custom_call.1} parent=1 // pred_region
      %588 = dma.done [#allocation4], 1024
    $region53: #{tpu_custom_call.1} parent=1 // pred_fallthru
      _
    // Predicated region
    $region54: #{tpu_custom_call.1} parent=1 // pred_check
      _
    $region55: #{tpu_custom_call.1} parent=1 // pred_check_branch
      %590 = sbr.rel (0) target = $region57
    $region56: #{tpu_custom_call.1} parent=1 // pred_region
      %591 = dma.done [#allocation13], 512
    $region57: #{tpu_custom_call.1} parent=1 // pred_fallthru
      _
    %592 = vsyncpa [#allocation3], 1
    %593 = vsyncpa [#allocation6], 1
    %594 = vsyncpa [#allocation9], 1
    %595 = vsyncpa [#allocation4], 1
    %596 = vsyncpa [#allocation13], 1

</llo_original>
